<compile_context>
chip_gen: v7x
topology: tpu7x:2x2x1
jax: 0.10.0
libtpu: 0.0.40
codegen_flags: <defaults>
</compile_context>

<pallas_src>
import jax
import jax.numpy as jnp
from jax import lax
from jax.experimental import pallas as pl
from jax.experimental.pallas import tpu as pltpu


def _reghead_kernel(x_ref, w_ref, b_ref, o_ref):
    # x_ref : (tn, C, HW)       VMEM  (batch tile of the NCHW input, spatial flattened)
    # w_ref : (C_out_pad, C)    VMEM  (PyTorch (out,in) layout, pre-scaled by 1/HW)
    # b_ref : (1, C_out_pad)    VMEM
    # o_ref : (tn, C_out_pad)   VMEM
    # Global average pool == sum (scale already folded into the weight); f32 accumulate.
    pooled = jnp.sum(x_ref[...], axis=-1, dtype=jnp.float32)        # (tn, C)

    w = w_ref[...]
    if w.dtype != jnp.float32:
        # bf16 weights: feed bf16 operands to the MXU (full rate) with f32 accumulation.
        pooled = pooled.astype(w.dtype)

    # pooled @ w.T on the MXU, without any host-side transpose of the weight.
    out = lax.dot_general(
        pooled, w,
        dimension_numbers=(((1,), (1,)), ((), ())),
        preferred_element_type=jnp.float32)                         # (tn, C_out_pad)

    o_ref[...] = (out + b_ref[...].astype(jnp.float32)).astype(o_ref.dtype)


def _pick_batch_tile(N, C, HW, itemsize):
    """Largest batch tile whose double-buffered x slab stays ~<= 12 MiB."""
    target_per_buf = 6 * 1024 * 1024
    per_row = C * HW * itemsize
    tn = max(1, target_per_buf // (2 * per_row))
    if tn >= N:
        return N
    # Output block (tn, C_out_pad): second-to-last dim must be a multiple of 8
    # (unless it equals the full array extent).
    tn = max(8, (tn // 8) * 8)
    return tn


def reg_head(x, weight, bias):
    """RegHead forward (eval mode).

    x      : (N, C_in, H, W)   (NCHW, like PyTorch)
    weight : (C_out, C_in)     (PyTorch nn.Linear layout)
    bias   : (C_out,)
    returns: (N, C_out)
    """
    N, C, H, W = x.shape
    C_out, C_in = weight.shape
    assert C_in == C, "weight in_features must match channel count"
    HW = H * W

    x_itemsize = jnp.dtype(x.dtype).itemsize
    w_itemsize = jnp.dtype(weight.dtype).itemsize

    # ---- host-side prep (tiny, fuses under jit) ------------------------------
    C_out_pad = max(128, pl.cdiv(C_out, 128) * 128)        # lane-dense output slab

    inv_hw = jnp.asarray(1.0 / float(HW), dtype=weight.dtype)
    w_p = weight * inv_hw                                   # fold pool scale into weight
    b_p = bias
    if C_out_pad != C_out:
        w_p = jnp.pad(w_p, ((0, C_out_pad - C_out), (0, 0)))
        b_p = jnp.pad(b_p, (0, C_out_pad - C_out))
    b2 = b_p.reshape(1, C_out_pad)

    tn = _pick_batch_tile(N, C, HW, x_itemsize)
    N_pad = pl.cdiv(N, tn) * tn

    x_flat = x.reshape(N, C, HW)                            # glue reshape (no compute)
    if N_pad != N:
        x_flat = jnp.pad(x_flat, ((0, N_pad - N), (0, 0), (0, 0)))

    grid = (N_pad // tn,)

    # ---- VMEM budget & cost hint --------------------------------------------
    out_itemsize = x_itemsize
    vmem_need = (2 * tn * C * HW * x_itemsize               # double-buffered x tile
                 + 2 * C_out_pad * C * w_itemsize           # resident weight (+ slack)
                 + 8 * C_out_pad * w_itemsize               # bias (sublane-padded)
                 + 2 * tn * C_out_pad * out_itemsize)       # double-buffered out tile
    vmem_limit = int(min(max(vmem_need * 1.25, 16 * 1024 * 1024),
                         56 * 1024 * 1024))                 # stay under v7x 64 MiB phys

    cost = pl.CostEstimate(
        flops=int(N_pad * C * HW + 2 * N_pad * C * C_out_pad),
        transcendentals=0,
        bytes_accessed=int(N_pad * C * HW * x_itemsize
                           + C_out_pad * C * w_itemsize
                           + C_out_pad * w_itemsize
                           + N_pad * C_out_pad * out_itemsize),
    )

    out_full = pl.pallas_call(
        _reghead_kernel,
        out_shape=jax.ShapeDtypeStruct((N_pad, C_out_pad), x.dtype),
        grid_spec=pltpu.PrefetchScalarGridSpec(
            num_scalar_prefetch=0,
            grid=grid,
            in_specs=[
                pl.BlockSpec((tn, C, HW), lambda i: (i, 0, 0)),     # batch-tiled x
                pl.BlockSpec((C_out_pad, C), lambda i: (0, 0)),     # resident weight
                pl.BlockSpec((1, C_out_pad), lambda i: (0, 0)),     # resident bias
            ],
            out_specs=pl.BlockSpec((tn, C_out_pad), lambda i: (i, 0)),
        ),
        compiler_params=pltpu.CompilerParams(
            dimension_semantics=("parallel",),                      # 2 TCs on v7x
            vmem_limit_bytes=vmem_limit),
        cost_estimate=cost,
    )(x_flat, w_p, b2)

    return out_full[:N, :C_out]


if __name__ == "__main__":
    # Small shapes consistent with the module (in_unit=C_in, out_unit=C_out, HxW spatial).
    N, C_in, H, W = 2, 32, 16, 16
    C_out = 64

    key = jax.random.PRNGKey(0)
    kx, kw, kb = jax.random.split(key, 3)

    x = jax.random.normal(kx, (N, C_in, H, W), dtype=jnp.float32)

    # Deterministic nn.Linear-style init: U(-1/sqrt(in), 1/sqrt(in))
    bound = 1.0 / (C_in ** 0.5)
    weight = jax.random.uniform(kw, (C_out, C_in), minval=-bound, maxval=bound,
                                dtype=jnp.float32)
    bias = jax.random.uniform(kb, (C_out,), minval=-bound, maxval=bound,
                              dtype=jnp.float32)

    out = reg_head(x, weight, bias)
    out = jax.block_until_ready(out)

    # Reference in plain JAX (same semantics as the PyTorch forward, eval mode).
    pooled_ref = jnp.mean(x, axis=(2, 3))          # AdaptiveAvgPool2d((1,1)) + flatten
    out_ref = pooled_ref @ weight.T + bias         # nn.Linear (dropout = identity in eval)
    assert out.shape == (N, C_out)
    assert jnp.allclose(out, out_ref, atol=1e-4, rtol=1e-5)

    print("KERNEL_OK")
</pallas_src>

<mosaic_0001>
module attributes {stable_mosaic.version = 11 : i64} {
  func.func @_reghead_kernel(%arg0: i32, %arg1: memref<2x32x256xf32, #tpu.memory_space<vmem>>, %arg2: memref<128x32xf32, #tpu.memory_space<vmem>>, %arg3: memref<1x128xf32, #tpu.memory_space<vmem>>, %arg4: memref<2x128xf32, #tpu.memory_space<vmem>>) attributes {dimension_semantics = [#tpu.dimension_semantics<parallel>], iteration_bounds = array<i64: 1>, scalar_prefetch = 0 : i64, scratch_operands = 0 : i64, tpu.core_type = #tpu.core_type<tc>, window_params = [{transform_indices = @transform_0, window_bounds = array<i64: 2, 32, 256>}, {pipeline_mode = #tpu.pipeline_mode<synchronous>, transform_indices = @transform_1, window_bounds = array<i64: 128, 32>}, {pipeline_mode = #tpu.pipeline_mode<synchronous>, transform_indices = @transform_2, window_bounds = array<i64: 1, 128>}, {transform_indices = @transform_3, window_bounds = array<i64: 2, 128>}]} {
    %c0 = arith.constant 0 : index
    %c0_0 = arith.constant 0 : index
    %c0_1 = arith.constant 0 : index
    %0 = vector.load %arg1[%c0, %c0_0, %c0_1] : memref<2x32x256xf32, #tpu.memory_space<vmem>>, vector<2x32x256xf32>
    %cst = arith.constant dense<0.000000e+00> : vector<2x32xf32>
    %1 = vector.multi_reduction <add>, %0, %cst [2] : vector<2x32x256xf32> to vector<2x32xf32>
    %c0_2 = arith.constant 0 : index
    %c0_3 = arith.constant 0 : index
    %2 = vector.load %arg2[%c0_2, %c0_3] : memref<128x32xf32, #tpu.memory_space<vmem>>, vector<128x32xf32>
    %cst_4 = arith.constant dense<0.000000e+00> : vector<2x128xf32>
    %3 = tpu.matmul %1, %2, %cst_4 {dimension_numbers = #tpu.dot_dimension_numbers<[1], [1], [0], [0], [0, 0, 1, 0], [], []>} : vector<2x32xf32>, vector<128x32xf32>, vector<2x128xf32> -> vector<2x128xf32>
    %c0_5 = arith.constant 0 : index
    %c0_6 = arith.constant 0 : index
    %4 = vector.load %arg3[%c0_5, %c0_6] : memref<1x128xf32, #tpu.memory_space<vmem>>, vector<1x128xf32>
    %5 = vector.broadcast %4 : vector<1x128xf32> to vector<2x128xf32>
    %6 = arith.addf %3, %5 : vector<2x128xf32>
    %c0_7 = arith.constant 0 : index
    %c0_8 = arith.constant 0 : index
    %7 = vector.load %arg4[%c0_7, %c0_8] : memref<2x128xf32, #tpu.memory_space<vmem>>, vector<2x128xf32>
    tpu.vector_store %arg4[%c0_7, %c0_8], %6 {strides = array<i32>} : memref<2x128xf32, #tpu.memory_space<vmem>>, vector<2x128xf32>,
    return
  }
  func.func @transform_0(%arg0: i32) -> (i32, i32, i32) {
    %c0_i32 = arith.constant 0 : i32
    %c0_i32_0 = arith.constant 0 : i32
    %c0_i32_1 = arith.constant 0 : i32
    return %arg0, %c0_i32, %c0_i32_0 : i32, i32, i32
  }
  func.func @transform_1(%arg0: i32) -> (i32, i32) {
    %c0_i32 = arith.constant 0 : i32
    %c0_i32_0 = arith.constant 0 : i32
    %c0_i32_1 = arith.constant 0 : i32
    return %c0_i32, %c0_i32_0 : i32, i32
  }
  func.func @transform_2(%arg0: i32) -> (i32, i32) {
    %c0_i32 = arith.constant 0 : i32
    %c0_i32_0 = arith.constant 0 : i32
    %c0_i32_1 = arith.constant 0 : i32
    return %c0_i32, %c0_i32_0 : i32, i32
  }
  func.func @transform_3(%arg0: i32) -> (i32, i32) {
    %c0_i32 = arith.constant 0 : i32
    %c0_i32_0 = arith.constant 0 : i32
    return %arg0, %c0_i32 : i32, i32
  }
}

</mosaic_0001>

<llo_original>
// kernel: tpu_custom_call.1
$region0: #{tpu_custom_call.1}
  #allocation0 [shape = 'u32[]', space=smem, size = 0x4, offset = 0x4, fixed_abs, tag = 'smem constant byte address 0x4 - core index']
  #allocation1 [shape = 'u32[144,128]{1,0:T(1,128)}', space=vmem, size = 0x12000, scoped, tag = 'internal scratch']
  %s0 = inlined_call_operand.vmem [shape: f32[2,32,256], index: 0, kind: input, shape index: {}]
  %s1 = inlined_call_operand.vmem [shape: f32[128,32], index: 1, kind: input, shape index: {}]
  %s2 = inlined_call_operand.vmem [shape: f32[1,128], index: 2, kind: input, shape index: {}]
  %s3 = inlined_call_operand.hbm [shape: f32[2,128], index: 3, kind: output, shape index: {}]
  %s4 = sld [smem:[#allocation0]]
  $region22: #{tpu_custom_call.1} parent=0
    _
  %s6 = ssub.s32 1, %s4
  %s7 = scalar_select 0, %s6, %s4
  $region1: #{tpu_custom_call.1} parent=0
    #allocation2 [shape = 'u8[1024]{0}', space=vmem, size = 0x400, scoped, tag = 'output window, operand 0, single buffered']
    #allocation3 [shape = 's32[1]{0}', space=sflag, size = 0x4, scoped, tag = 'scoped memory for tpu_custom_call.1']
    %8 = vsyncpa [#allocation3], 0
    // Predicated region
    $region2: #{tpu_custom_call.1} parent=1 // pred_check
      _
    $region3: #{tpu_custom_call.1} parent=1 // pred_check_branch
      %10 = sbr.rel (0) target = $region5
    $region4: #{tpu_custom_call.1} parent=1 // pred_region
      _
    $region5: #{tpu_custom_call.1} parent=1 // pred_fallthru
      _
    // Predicated region
    $region6: #{tpu_custom_call.1} parent=1 // pred_check
      _
    $region7: #{tpu_custom_call.1} parent=1 // pred_check_branch
      %12 = sbr.rel (0) target = $region9
    $region8: #{tpu_custom_call.1} parent=1 // pred_region
      _
    $region9: #{tpu_custom_call.1} parent=1 // pred_fallthru
      _
    // Predicated region
    $region10: #{tpu_custom_call.1} parent=1 // pred_check
      _
    $region11: #{tpu_custom_call.1} parent=1 // pred_check_branch
      %14 = sbr.rel (0) target = $region13
    $region12: #{tpu_custom_call.1} parent=1 // pred_region
      _
    $region13: #{tpu_custom_call.1} parent=1 // pred_fallthru
      _
    %v15 = vld [vmem:[%s0] sm:$0xff]
    %v16 = vld [vmem:[%s0 + $0x8] sm:$0xff]
    %v17 = vld [vmem:[%s0 + $0x10] sm:$0xff]
    %v18 = vld [vmem:[%s0 + $0x18] sm:$0xff]
    %v19 = vld [vmem:[%s0 + $0x20] sm:$0xff]
    %v20 = vld [vmem:[%s0 + $0x28] sm:$0xff]
    %v21 = vld [vmem:[%s0 + $0x30] sm:$0xff]
    %v22 = vld [vmem:[%s0 + $0x38] sm:$0xff]
    %v23 = vld [vmem:[%s0 + $0x40] sm:$0xff]
    %v24 = vld [vmem:[%s0 + $0x48] sm:$0xff]
    %v25 = vld [vmem:[%s0 + $0x50] sm:$0xff]
    %v26 = vld [vmem:[%s0 + $0x58] sm:$0xff]
    %v27 = vld [vmem:[%s0 + $0x60] sm:$0xff]
    %v28 = vld [vmem:[%s0 + $0x68] sm:$0xff]
    %v29 = vld [vmem:[%s0 + $0x70] sm:$0xff]
    %v30 = vld [vmem:[%s0 + $0x78] sm:$0xff]
    %v31 = vadd.f32 %v15, %v16
    %32 = vadd.xlane.f32.xlu0 %v31
    %v33 = vpop.xlane.xlu0 %32
    %v34 = vadd.f32 %v17, %v18
    %35 = vadd.xlane.f32.xlu0 %v34
    %v36 = vpop.xlane.xlu0 %35
    %v37 = vadd.f32 %v19, %v20
    %38 = vadd.xlane.f32.xlu0 %v37
    %v39 = vpop.xlane.xlu0 %38
    %v40 = vadd.f32 %v21, %v22
    %41 = vadd.xlane.f32.xlu0 %v40
    %v42 = vpop.xlane.xlu0 %41
    %v43 = vadd.f32 %v23, %v24
    %44 = vadd.xlane.f32.xlu0 %v43
    %v45 = vpop.xlane.xlu0 %44
    %v46 = vadd.f32 %v25, %v26
    %47 = vadd.xlane.f32.xlu0 %v46
    %v48 = vpop.xlane.xlu0 %47
    %v49 = vadd.f32 %v27, %v28
    %50 = vadd.xlane.f32.xlu0 %v49
    %v51 = vpop.xlane.xlu0 %50
    %v52 = vadd.f32 %v29, %v30
    %53 = vadd.xlane.f32.xlu0 %v52
    %v54 = vpop.xlane.xlu0 %53
    %v55 = vld [vmem:[%s1] sm:$0xff]
    %v56 = vld [vmem:[%s1 + $0x8] sm:$0xff]
    %v57 = vld [vmem:[%s1 + $0x10] sm:$0xff]
    %v58 = vld [vmem:[%s1 + $0x18] sm:$0xff]
    %v59 = vld [vmem:[%s1 + $0x20] sm:$0xff]
    %v60 = vld [vmem:[%s1 + $0x28] sm:$0xff]
    %v61 = vld [vmem:[%s1 + $0x30] sm:$0xff]
    %v62 = vld [vmem:[%s1 + $0x38] sm:$0xff]
    %v63 = vld [vmem:[%s1 + $0x40] sm:$0xff]
    %v64 = vld [vmem:[%s1 + $0x48] sm:$0xff]
    %v65 = vld [vmem:[%s1 + $0x50] sm:$0xff]
    %v66 = vld [vmem:[%s1 + $0x58] sm:$0xff]
    %v67 = vld [vmem:[%s1 + $0x60] sm:$0xff]
    %v68 = vld [vmem:[%s1 + $0x68] sm:$0xff]
    %v69 = vld [vmem:[%s1 + $0x70] sm:$0xff]
    %v70 = vld [vmem:[%s1 + $0x78] sm:$0xff]
    %v71 = vld [vmem:[%s2] sm:$0x1]
    %v73 = vlaneseq
    %v74 = vshrl.u32 %v73, 7
    %v75 = vsub.s32 0, %v74
    %v76 = vrot.slane %v71, %v75
    %v86 = vlaneseq
    %v87 = vand.u32 %v86, 127
    %v88 = vlaneseq
    %v89 = vshrl.u32 %v88, 7
    %v90 = vsub.s32 %v87, %v89
    %v91 = vrot.slane %v33, %v90
    %v92 = vadd.s32 %v87, 4294967288
    %v93 = vlaneseq
    %v94 = vshrl.u32 %v93, 7
    %v95 = vsub.s32 %v92, %v94
    %v96 = vrot.slane %v36, %v95
    %vm97 = vcmask 130112
    %v98 = vsel %vm97, %v96, %v91
    %v99 = vadd.s32 %v87, 4294967280
    %v100 = vlaneseq
    %v101 = vshrl.u32 %v100, 7
    %v102 = vsub.s32 %v99, %v101
    %v103 = vrot.slane %v39, %v102
    %vm104 = vcmask 195712
    %v105 = vsel %vm104, %v103, %v98
    %v106 = vadd.s32 %v87, 4294967272
    %v107 = vlaneseq
    %v108 = vshrl.u32 %v107, 7
    %v109 = vsub.s32 %v106, %v108
    %v110 = vrot.slane %v42, %v109
    %vm111 = vcmask 261312
    %v112 = vsel %vm111, %v110, %v105
    %v113 = vlaneseq
    %v114 = vshrl.u32 %v113, 7
    %v115 = vsub.s32 %v87, %v114
    %v116 = vrot.slane %v45, %v115
    %v117 = vlaneseq
    %v118 = vshrl.u32 %v117, 7
    %v119 = vsub.s32 %v92, %v118
    %v120 = vrot.slane %v48, %v119
    %v121 = vsel %vm97, %v120, %v116
    %v122 = vlaneseq
    %v123 = vshrl.u32 %v122, 7
    %v124 = vsub.s32 %v99, %v123
    %v125 = vrot.slane %v51, %v124
    %v126 = vsel %vm104, %v125, %v121
    %v127 = vlaneseq
    %v128 = vshrl.u32 %v127, 7
    %v129 = vsub.s32 %v106, %v128
    %v130 = vrot.slane %v54, %v129
    %v131 = vsel %vm111, %v130, %v126
    %vm132 = vcmask 1041409
    %v133 = vsel %vm132, %v131, %v112
    %vm134 = vcmask 261120
    %v135 = vsel %vm134, %v133, 0
    %v138 = vsel %vm134, %v55, 0
    %v141 = vsel %vm134, %v56, 0
    %v144 = vsel %vm134, %v57, 0
    %v147 = vsel %vm134, %v58, 0
    %v150 = vsel %vm134, %v59, 0
    %v153 = vsel %vm134, %v60, 0
    %v156 = vsel %vm134, %v61, 0
    %v159 = vsel %vm134, %v62, 0
    %v162 = vsel %vm134, %v63, 0
    %v165 = vsel %vm134, %v64, 0
    %v168 = vsel %vm134, %v65, 0
    %v171 = vsel %vm134, %v66, 0
    %v174 = vsel %vm134, %v67, 0
    %v177 = vsel %vm134, %v68, 0
    %v180 = vsel %vm134, %v69, 0
    %v183 = vsel %vm134, %v70, 0
    %185 = vmatprep.subr.mxu0 0.0
    %186 = vmatpush1.xpose.msra.mxu0 %v138
    %187 = vmatprep.subr.mxu0 0.0
    %188 = vmatpush1.xpose.msra.mxu0 %v141
    %189 = vmatprep.subr.mxu0 0.0
    %190 = vmatpush1.xpose.msra.mxu0 %v144
    %191 = vmatprep.subr.mxu0 0.0
    %192 = vmatpush1.xpose.msra.mxu0 %v147
    %193 = vmatprep.subr.mxu0 0.0
    %194 = vmatpush1.xpose.msra.mxu0 %v150
    %195 = vmatprep.subr.mxu0 0.0
    %196 = vmatpush1.xpose.msra.mxu0 %v153
    %197 = vmatprep.subr.mxu0 0.0
    %198 = vmatpush1.xpose.msra.mxu0 %v156
    %199 = vmatprep.subr.mxu0 0.0
    %200 = vmatpush1.xpose.msra.mxu0 %v159
    %201 = vmatprep.subr.mxu0 0.0
    %202 = vmatpush1.xpose.msra.mxu0 %v162
    %203 = vmatprep.subr.mxu0 0.0
    %204 = vmatpush1.xpose.msra.mxu0 %v165
    %205 = vmatprep.subr.mxu0 0.0
    %206 = vmatpush1.xpose.msra.mxu0 %v168
    %207 = vmatprep.subr.mxu0 0.0
    %208 = vmatpush1.xpose.msra.mxu0 %v171
    %209 = vmatprep.subr.mxu0 0.0
    %210 = vmatpush1.xpose.msra.mxu0 %v174
    %211 = vmatprep.subr.mxu0 0.0
    %212 = vmatpush1.xpose.msra.mxu0 %v177
    %213 = vmatprep.subr.mxu0 0.0
    %214 = vmatpush1.xpose.msra.mxu0 %v180
    %215 = vmatprep.subr.mxu0 0.0
    %216 = vmatpush1.xpose.msra.mxu0 %v183
    %217 = vmatprep.subr.mxu0 0.0
    %218 = vmatpush1.xpose.msra.mxu0 0.0
    %219 = vmatprep.subr.mxu0 0.0
    %220 = vmatpush1.xpose.msra.mxu0 0.0
    %221 = vmatprep.subr.mxu0 0.0
    %222 = vmatpush1.xpose.msra.mxu0 0.0
    %223 = vmatprep.subr.mxu0 0.0
    %224 = vmatpush1.xpose.msra.mxu0 0.0
    %225 = vmatprep.subr.mxu0 0.0
    %226 = vmatpush1.xpose.msra.mxu0 0.0
    %227 = vmatprep.subr.mxu0 0.0
    %228 = vmatpush1.xpose.msra.mxu0 0.0
    %229 = vmatprep.subr.mxu0 0.0
    %230 = vmatpush1.xpose.msra.mxu0 0.0
    %231 = vmatprep.subr.mxu0 0.0
    %232 = vmatpush1.xpose.msra.mxu0 0.0
    %233 = vmatprep.subr.mxu0 0.0
    %234 = vmatpush1.xpose.msra.mxu0 0.0
    %235 = vmatprep.subr.mxu0 0.0
    %236 = vmatpush1.xpose.msra.mxu0 0.0
    %237 = vmatprep.subr.mxu0 0.0
    %238 = vmatpush1.xpose.msra.mxu0 0.0
    %239 = vmatprep.subr.mxu0 0.0
    %240 = vmatpush1.xpose.msra.mxu0 0.0
    %241 = vmatprep.subr.mxu0 0.0
    %242 = vmatpush1.xpose.msra.mxu0 0.0
    %243 = vmatprep.subr.mxu0 0.0
    %244 = vmatpush1.xpose.msra.mxu0 0.0
    %245 = vmatprep.subr.mxu0 0.0
    %246 = vmatpush1.xpose.msra.mxu0 0.0
    %247 = vmatprep.subr.mxu0 0.0
    %248 = vmatpush1.xpose.msra.mxu0 0.0
    %249 = vmatprep.mubr.f32.mxu0 0.0
    %250 = vmatmul.mubr.f32.gmra.mrb[0].mxu0 %v135
    %v251 = vpop.f32.mrb[0].mxu0
    %v252 = vadd.f32 %v76, %v251
    %v253 = vpop.f32.mrb[0].mxu0
    %254 = vdwg.mxu0
    %255 = vst [vmem:[#allocation2] sm:$0x3] %v252
    // Predicated region
    $region14: #{tpu_custom_call.1} parent=1 // pred_check
      _
    $region15: #{tpu_custom_call.1} parent=1 // pred_check_branch
      %257 = sbr.rel (0) target = $region17
    $region16: #{tpu_custom_call.1} parent=1 // pred_region
      %s259 = ssub.s32 32, 32
      %260 = vsyncadd [#allocation3], %s259
      %s262 = sshll.u32 [#allocation2], 4
      %s263 = int_to_ptr.vmem [resolvable:$true] %s262
      %265 = dma.vmem_to_hbm [thread:$0]  %s263, 32, %s3, [#allocation3]
    $region17: #{tpu_custom_call.1} parent=1 // pred_fallthru
      _
    // Predicated region
    $region18: #{tpu_custom_call.1} parent=1 // pred_check
      _
    $region19: #{tpu_custom_call.1} parent=1 // pred_check_branch
      %267 = sbr.rel (0) target = $region21
    $region20: #{tpu_custom_call.1} parent=1 // pred_region
      %268 = dma.done [#allocation3], 32
    $region21: #{tpu_custom_call.1} parent=1 // pred_fallthru
      _
    %269 = vsyncpa [#allocation3], 1

</llo_original>
